<compile_context>
chip_gen: v5e
topology: v5e:2x2
jax: 0.10.0
libtpu: 0.0.40
codegen_flags: <defaults>
</compile_context>

<pallas_src>
import jax
import jax.numpy as jnp
from jax.experimental import pallas as pl
from jax.experimental.pallas import tpu as pltpu


def _knn_neg_sampler_kernel(trg_ref, ngb_ref, scr_ref, out_ref):
    # trg_ref : SMEM (S,) int32        -- all positive locations (scalar prefetch)
    # ngb_ref : VMEM (B, Kp) int32     -- lane-padded neighbor rows of this block
    # scr_ref : VMEM (B, N, Kp) int32  -- random scores (padded cols forced to -2)
    # out_ref : VMEM (B, N) int32      -- negative samples for this block
    S = trg_ref.shape[0]
    ngb = ngb_ref[...]          # (B, Kp)
    scores = scr_ref[...]       # (B, N, Kp)

    # Positive-membership mask, computed once per (B, Kp) tile.
    # S is small & static -> unrolled scalar compares against SMEM values.
    is_pos = ngb == trg_ref[0]
    for s in range(1, S):
        is_pos = jnp.logical_or(is_pos, ngb == trg_ref[s])

    # Mask positives to -1 (padded columns already hold -2, so they always
    # lose to a real column).  One batched lane-reduce picks, per
    # (row, negative-slot), the max-score surviving neighbor: an exact uniform
    # draw over the non-positive neighbors == the PyTorch rejection loop.
    neg_inf = jnp.int32(-2147483647)
    masked = jnp.where(is_pos[:, None, :], jnp.int32(-1), scores)       # (B,N,Kp)
    mx = jnp.max(masked, axis=-1, keepdims=True)                        # (B,N,1)
    sel = jnp.max(jnp.where(masked == mx, ngb[:, None, :], neg_inf),
                  axis=-1)                                              # (B,N)
    out_ref[...] = sel


def knn_sampler_train_multi(trg_locs, neighbor_table, n_neg, seed=0,
                            block_rows=512):
    """trg_locs: (S,) int32 target location ids (the pos_samples).
       neighbor_table: (num_locs, K) int32 -- loc_query_system.get(loc, K).
       returns (S, n_neg) int32 negative samples."""
    trg_locs = trg_locs.astype(jnp.int32)
    neighbor_table = neighbor_table.astype(jnp.int32)
    S = trg_locs.shape[0]
    K = neighbor_table.shape[1]

    # ---- one-shot wrapper prep: row gather + PRNG draw + lane/sublane pad ----
    LANE = 128
    Kp = ((K + LANE - 1) // LANE) * LANE                  # pad K to lane width

    ngb = neighbor_table[trg_locs]                        # (S, K) single gather
    ngb = jnp.pad(ngb, ((0, 0), (0, Kp - K)), constant_values=-1)

    key = jax.random.PRNGKey(seed)
    scores = jax.random.randint(key, (S, n_neg, Kp), 0, 2**31 - 1,
                                dtype=jnp.int32)
    col_ok = (jnp.arange(Kp, dtype=jnp.int32) < K)[None, None, :]
    scores = jnp.where(col_ok, scores, jnp.int32(-2))     # padded cols never win

    # pad the row axis to a multiple of 8 sublanes (and of the row-block size)
    Sp = ((S + 7) // 8) * 8
    br = min(block_rows, Sp)
    Sp = ((Sp + br - 1) // br) * br
    if Sp != S:
        ngb = jnp.pad(ngb, ((0, Sp - S), (0, 0)), constant_values=-1)
        scores = jnp.pad(scores, ((0, Sp - S), (0, 0), (0, 0)),
                         constant_values=-2)

    grid_spec = pltpu.PrefetchScalarGridSpec(
        num_scalar_prefetch=1,
        grid=(Sp // br,),
        in_specs=[
            pl.BlockSpec((br, Kp), lambda r, trg: (r, 0)),
            pl.BlockSpec((br, n_neg, Kp), lambda r, trg: (r, 0, 0)),
        ],
        out_specs=pl.BlockSpec((br, n_neg), lambda r, trg: (r, 0)),
    )

    out = pl.pallas_call(
        _knn_neg_sampler_kernel,
        out_shape=jax.ShapeDtypeStruct((Sp, n_neg), jnp.int32),
        grid_spec=grid_spec,
        compiler_params=pltpu.CompilerParams(
            dimension_semantics=("parallel",)),   # row blocks are independent
    )(trg_locs, ngb, scores)
    return out[:S]


if __name__ == "__main__":
    key = jax.random.PRNGKey(0)

    S = 8            # sequence length (number of check-ins)
    num_locs = 64    # total locations
    K = 16           # n_neighbor
    n_neg = 4        # negatives per check-in

    # "loc_query_system": K nearest neighbors of loc are the next K loc ids
    # (a deterministic stand-in for the KNN index).
    locs = jnp.arange(num_locs, dtype=jnp.int32)
    neighbor_table = (locs[:, None]
                      + jnp.arange(1, K + 1, dtype=jnp.int32)[None, :]) % num_locs

    # target sequence: the location id of each check-in (e[1] in the module)
    trg_locs = jax.random.randint(key, (S,), 0, num_locs, dtype=jnp.int32)

    neg = knn_sampler_train_multi(trg_locs, neighbor_table, n_neg, seed=0)
    neg = jax.block_until_ready(neg)

    # sanity: every negative is a neighbor of its target and not a positive
    import numpy as np
    neg_np = np.asarray(neg)
    trg_np = np.asarray(trg_locs)
    tbl_np = np.asarray(neighbor_table)
    pos_set = set(trg_np.tolist())
    assert neg_np.shape == (S, n_neg)
    for i in range(S):
        row_neighbors = set(tbl_np[trg_np[i]].tolist())
        for j in range(n_neg):
            assert int(neg_np[i, j]) in row_neighbors
            assert int(neg_np[i, j]) not in pos_set

    print("KERNEL_OK")
</pallas_src>

<mosaic_0001>
module attributes {stable_mosaic.version = 11 : i64} {
  func.func @_knn_neg_sampler_kernel(%arg0: i32, %arg1: memref<8xi32, #tpu.memory_space<smem>>, %arg2: memref<8x128xi32, #tpu.memory_space<vmem>>, %arg3: memref<8x4x128xi32, #tpu.memory_space<vmem>>, %arg4: memref<8x4xi32, #tpu.memory_space<vmem>>) attributes {dimension_semantics = [#tpu.dimension_semantics<parallel>], iteration_bounds = array<i64: 1>, scalar_prefetch = 1 : i64, scratch_operands = 0 : i64, tpu.core_type = #tpu.core_type<tc>, window_params = [{transform_indices = @transform_0, window_bounds = array<i64: 8, 128>}, {transform_indices = @transform_1, window_bounds = array<i64: 8, 4, 128>}, {transform_indices = @transform_2, window_bounds = array<i64: 8, 4>}]} {
    %c0 = arith.constant 0 : index
    %c0_0 = arith.constant 0 : index
    %0 = vector.load %arg2[%c0, %c0_0] : memref<8x128xi32, #tpu.memory_space<vmem>>, vector<8x128xi32>
    %c0_1 = arith.constant 0 : index
    %c0_2 = arith.constant 0 : index
    %c0_3 = arith.constant 0 : index
    %1 = vector.load %arg3[%c0_1, %c0_2, %c0_3] : memref<8x4x128xi32, #tpu.memory_space<vmem>>, vector<8x4x128xi32>
    %c0_4 = arith.constant 0 : index
    %2 = memref.load %arg1[%c0_4] : memref<8xi32, #tpu.memory_space<smem>>
    %3 = vector.broadcast %2 : i32 to vector<8x128xi32>
    %4 = arith.cmpi eq, %0, %3 : vector<8x128xi32>
    %c1 = arith.constant 1 : index
    %5 = memref.load %arg1[%c1] : memref<8xi32, #tpu.memory_space<smem>>
    %6 = vector.broadcast %5 : i32 to vector<8x128xi32>
    %7 = arith.cmpi eq, %0, %6 : vector<8x128xi32>
    %8 = arith.ori %4, %7 : vector<8x128xi1>
    %c2 = arith.constant 2 : index
    %9 = memref.load %arg1[%c2] : memref<8xi32, #tpu.memory_space<smem>>
    %10 = vector.broadcast %9 : i32 to vector<8x128xi32>
    %11 = arith.cmpi eq, %0, %10 : vector<8x128xi32>
    %12 = arith.ori %8, %11 : vector<8x128xi1>
    %c3 = arith.constant 3 : index
    %13 = memref.load %arg1[%c3] : memref<8xi32, #tpu.memory_space<smem>>
    %14 = vector.broadcast %13 : i32 to vector<8x128xi32>
    %15 = arith.cmpi eq, %0, %14 : vector<8x128xi32>
    %16 = arith.ori %12, %15 : vector<8x128xi1>
    %c4 = arith.constant 4 : index
    %17 = memref.load %arg1[%c4] : memref<8xi32, #tpu.memory_space<smem>>
    %18 = vector.broadcast %17 : i32 to vector<8x128xi32>
    %19 = arith.cmpi eq, %0, %18 : vector<8x128xi32>
    %20 = arith.ori %16, %19 : vector<8x128xi1>
    %c5 = arith.constant 5 : index
    %21 = memref.load %arg1[%c5] : memref<8xi32, #tpu.memory_space<smem>>
    %22 = vector.broadcast %21 : i32 to vector<8x128xi32>
    %23 = arith.cmpi eq, %0, %22 : vector<8x128xi32>
    %24 = arith.ori %20, %23 : vector<8x128xi1>
    %c6 = arith.constant 6 : index
    %25 = memref.load %arg1[%c6] : memref<8xi32, #tpu.memory_space<smem>>
    %26 = vector.broadcast %25 : i32 to vector<8x128xi32>
    %27 = arith.cmpi eq, %0, %26 : vector<8x128xi32>
    %28 = arith.ori %24, %27 : vector<8x128xi1>
    %c7 = arith.constant 7 : index
    %29 = memref.load %arg1[%c7] : memref<8xi32, #tpu.memory_space<smem>>
    %30 = vector.broadcast %29 : i32 to vector<8x128xi32>
    %31 = arith.cmpi eq, %0, %30 : vector<8x128xi32>
    %32 = arith.ori %28, %31 : vector<8x128xi1>
    %33 = vector.shape_cast %32 : vector<8x128xi1> to vector<8x1x128xi1>
    %c-1_i32 = arith.constant -1 : i32
    %34 = vector.shape_cast %33 : vector<8x1x128xi1> to vector<8x1x128xi1>
    %35 = vector.broadcast %34 : vector<8x1x128xi1> to vector<8x4x128xi1>
    %36 = vector.broadcast %c-1_i32 : i32 to vector<8x4x128xi32>
    %37 = arith.select %35, %36, %1 : vector<8x4x128xi1>, vector<8x4x128xi32>
    %cst = arith.constant dense<-2147483648> : vector<8x4xi32>
    %38 = vector.multi_reduction <maxsi>, %37, %cst [2] : vector<8x4x128xi32> to vector<8x4xi32>
    %39 = vector.shape_cast %38 : vector<8x4xi32> to vector<8x4x1xi32>
    %40 = vector.broadcast %39 : vector<8x4x1xi32> to vector<8x4x128xi32>
    %41 = arith.cmpi eq, %37, %40 : vector<8x4x128xi32>
    %42 = vector.shape_cast %0 : vector<8x128xi32> to vector<8x1x128xi32>
    %c-2147483647_i32 = arith.constant -2147483647 : i32
    %43 = vector.shape_cast %42 : vector<8x1x128xi32> to vector<8x1x128xi32>
    %44 = vector.broadcast %43 : vector<8x1x128xi32> to vector<8x4x128xi32>
    %45 = vector.broadcast %c-2147483647_i32 : i32 to vector<8x4x128xi32>
    %46 = arith.select %41, %44, %45 : vector<8x4x128xi1>, vector<8x4x128xi32>
    %cst_5 = arith.constant dense<-2147483648> : vector<8x4xi32>
    %47 = vector.multi_reduction <maxsi>, %46, %cst_5 [2] : vector<8x4x128xi32> to vector<8x4xi32>
    %c0_6 = arith.constant 0 : index
    %c0_7 = arith.constant 0 : index
    %48 = vector.load %arg4[%c0_6, %c0_7] : memref<8x4xi32, #tpu.memory_space<vmem>>, vector<8x4xi32>
    tpu.vector_store %arg4[%c0_6, %c0_7], %47 {strides = array<i32>} : memref<8x4xi32, #tpu.memory_space<vmem>>, vector<8x4xi32>,
    return
  }
  func.func @transform_0(%arg0: i32, %arg1: memref<8xi32, #tpu.memory_space<smem>>) -> (i32, i32) {
    %c0_i32 = arith.constant 0 : i32
    %c0_i32_0 = arith.constant 0 : i32
    return %arg0, %c0_i32 : i32, i32
  }
  func.func @transform_1(%arg0: i32, %arg1: memref<8xi32, #tpu.memory_space<smem>>) -> (i32, i32, i32) {
    %c0_i32 = arith.constant 0 : i32
    %c0_i32_0 = arith.constant 0 : i32
    %c0_i32_1 = arith.constant 0 : i32
    return %arg0, %c0_i32, %c0_i32_0 : i32, i32, i32
  }
  func.func @transform_2(%arg0: i32, %arg1: memref<8xi32, #tpu.memory_space<smem>>) -> (i32, i32) {
    %c0_i32 = arith.constant 0 : i32
    %c0_i32_0 = arith.constant 0 : i32
    return %arg0, %c0_i32 : i32, i32
  }
}

</mosaic_0001>

<llo_original>
// kernel: tpu_custom_call.1
$region0: #{tpu_custom_call.1}
  #allocation0 [shape = 'u32[]', space=smem, size = 0x4, offset = 0x4, fixed_abs, tag = 'smem constant byte address 0x4 - core index']
  #allocation1 [shape = 'u32[72,128]{1,0:T(1,128)}', space=vmem, size = 0x9000, scoped, tag = 'internal scratch']
  #allocation2 [shape = 's32[1]{0}', space=sflag, size = 0x4, scoped, tag = 'scoped memory for tpu_custom_call.1']
  #allocation3 [shape = 'u8[512]{0}', space=smem, size = 0x200, scoped, tag = 'prefetched SMEM operand 0']
  %s0 = inlined_call_operand.hbm [shape: s32[8], index: 0, kind: input, shape index: {}]
  %s1 = inlined_call_operand.hbm [shape: s32[8,128], index: 1, kind: input, shape index: {}]
  %s2 = inlined_call_operand.hbm [shape: s32[8,4,128], index: 2, kind: input, shape index: {}]
  %s3 = inlined_call_operand.vmem [shape: s32[8,4], index: 3, kind: output, shape index: {}]
  %s4 = sld [smem:[#allocation0]]
  $region26: #{tpu_custom_call.1} parent=0
    _
  %s6 = ssub.s32 1, %s4
  %s7 = scalar_select 0, %s6, %s4
  %s9 = sshll.u32 %s0, 4
  %s10 = int_to_ptr.hbm [resolvable:$true] %s9
  %12 = dma.hbm_to_smem %s10, 16, [#allocation3], [#allocation2]
  %14 = dma.done [#allocation2], 16
  %15 = sfence
  $region1: #{tpu_custom_call.1} parent=0
    #allocation4 [shape = 'u8[4096]{0}', space=vmem, size = 0x1000, scoped, tag = 'input window, operand 1, single buffered']
    #allocation5 [shape = 's32[1]{0}', space=sflag, size = 0x4, scoped, tag = 'scoped memory for tpu_custom_call.1']
    #allocation6 [shape = 'u8[16384]{0}', space=vmem, size = 0x4000, scoped, tag = 'input window, operand 2, single buffered']
    #allocation7 [shape = 's32[1]{0}', space=sflag, size = 0x4, scoped, tag = 'scoped memory for tpu_custom_call.1']
    %16 = vsyncpa [#allocation5], 0
    %17 = vsyncpa [#allocation7], 0
    // Predicated region
    $region2: #{tpu_custom_call.1} parent=1 // pred_check
      _
    $region3: #{tpu_custom_call.1} parent=1 // pred_check_branch
      %19 = sbr.rel (0) target = $region5
    $region4: #{tpu_custom_call.1} parent=1 // pred_region
      %21 = vsyncadd [#allocation5], 0
      %s23 = sshll.u32 %s1, 4
      %s24 = int_to_ptr.hbm [resolvable:$true] %s23
      %s25 = sshll.u32 [#allocation4], 4
      %s26 = int_to_ptr.vmem [resolvable:$true] %s25
      %28 = dma.hbm_to_vmem [thread:$0]  %s24, 128, %s26, [#allocation5]
    $region5: #{tpu_custom_call.1} parent=1 // pred_fallthru
      _
    // Predicated region
    $region6: #{tpu_custom_call.1} parent=1 // pred_check
      _
    $region7: #{tpu_custom_call.1} parent=1 // pred_check_branch
      %30 = sbr.rel (0) target = $region9
    $region8: #{tpu_custom_call.1} parent=1 // pred_region
      %32 = vsyncadd [#allocation7], 0
      %s33 = sshll.u32 %s2, 4
      %s34 = int_to_ptr.hbm [resolvable:$true] %s33
      %s35 = sshll.u32 [#allocation6], 4
      %s36 = int_to_ptr.vmem [resolvable:$true] %s35
      %41 = dma.hbm_to_vmem [thread:$0]  %s34, 512, %s36, [#allocation7], 64, 64, 4
    $region9: #{tpu_custom_call.1} parent=1 // pred_fallthru
      _
    // Predicated region
    $region10: #{tpu_custom_call.1} parent=1 // pred_check
      _
    $region11: #{tpu_custom_call.1} parent=1 // pred_check_branch
      %43 = sbr.rel (0) target = $region13
    $region12: #{tpu_custom_call.1} parent=1 // pred_region
      %45 = dma.done [#allocation5], 128
    $region13: #{tpu_custom_call.1} parent=1 // pred_fallthru
      _
    // Predicated region
    $region14: #{tpu_custom_call.1} parent=1 // pred_check
      _
    $region15: #{tpu_custom_call.1} parent=1 // pred_check_branch
      %47 = sbr.rel (0) target = $region17
    $region16: #{tpu_custom_call.1} parent=1 // pred_region
      %49 = dma.done [#allocation7], 512
    $region17: #{tpu_custom_call.1} parent=1 // pred_fallthru
      _
    %v50 = vld [vmem:[#allocation4] sm:$0xff]
    %v51 = vld [vmem:[#allocation6] sm:$0xf]
    %v52 = vld [vmem:[#allocation6 + $0x4] sm:$0xf]
    %v53 = vld [vmem:[#allocation6 + $0x8] sm:$0xf]
    %v54 = vld [vmem:[#allocation6 + $0xc] sm:$0xf]
    %v55 = vld [vmem:[#allocation6 + $0x10] sm:$0xf]
    %v56 = vld [vmem:[#allocation6 + $0x14] sm:$0xf]
    %v57 = vld [vmem:[#allocation6 + $0x18] sm:$0xf]
    %v58 = vld [vmem:[#allocation6 + $0x1c] sm:$0xf]
    %s59 = sld [smem:[#allocation3]]
    %v60 = vstv %s59
    %vm61 = vcmp.eq.s32.totalorder %v50, %v60
    %s62 = sld [smem:[#allocation3 + $0x1]]
    %v63 = vstv %s62
    %vm64 = vcmp.eq.s32.totalorder %v50, %v63
    %vm65 = vmor %vm61, %vm64
    %s66 = sld [smem:[#allocation3 + $0x2]]
    %v67 = vstv %s66
    %vm68 = vcmp.eq.s32.totalorder %v50, %v67
    %vm69 = vmor %vm65, %vm68
    %s70 = sld [smem:[#allocation3 + $0x3]]
    %v71 = vstv %s70
    %vm72 = vcmp.eq.s32.totalorder %v50, %v71
    %vm73 = vmor %vm69, %vm72
    %s74 = sld [smem:[#allocation3 + $0x4]]
    %v75 = vstv %s74
    %vm76 = vcmp.eq.s32.totalorder %v50, %v75
    %vm77 = vmor %vm73, %vm76
    %s78 = sld [smem:[#allocation3 + $0x5]]
    %v79 = vstv %s78
    %vm80 = vcmp.eq.s32.totalorder %v50, %v79
    %vm81 = vmor %vm77, %vm80
    %s82 = sld [smem:[#allocation3 + $0x6]]
    %v83 = vstv %s82
    %vm84 = vcmp.eq.s32.totalorder %v50, %v83
    %vm85 = vmor %vm81, %vm84
    %s86 = sld [smem:[#allocation3 + $0x7]]
    %v87 = vstv %s86
    %vm88 = vcmp.eq.s32.totalorder %v50, %v87
    %vm89 = vmor %vm85, %vm88
    %v90 = vsel %vm89, 1, 0
    %v91 = vrot.slane %v90, 1
    %v92 = vrot.slane %v90, 2
    %v93 = vrot.slane %v90, 3
    %v94 = vrot.slane %v90, 4
    %v95 = vrot.slane %v90, 5
    %v96 = vrot.slane %v90, 6
    %v97 = vrot.slane %v90, 7
    %vm98 = vcmp.ne.s32.totalorder %v91, 0
    %vm99 = vcmp.ne.s32.totalorder %v92, 0
    %vm100 = vcmp.ne.s32.totalorder %v93, 0
    %vm101 = vcmp.ne.s32.totalorder %v94, 0
    %vm102 = vcmp.ne.s32.totalorder %v95, 0
    %vm103 = vcmp.ne.s32.totalorder %v96, 0
    %vm104 = vcmp.ne.s32.totalorder %v97, 0
    %v105 = vsel %vm98, 1, 0
    %v106 = vsel %vm99, 1, 0
    %v107 = vsel %vm100, 1, 0
    %v108 = vsel %vm101, 1, 0
    %v109 = vsel %vm102, 1, 0
    %v110 = vsel %vm103, 1, 0
    %v111 = vsel %vm104, 1, 0
    %v112 = vperm.slane %v90, 0
    %v113 = vperm.slane %v105, 0
    %v114 = vperm.slane %v106, 0
    %v115 = vperm.slane %v107, 0
    %v116 = vperm.slane %v108, 0
    %v117 = vperm.slane %v109, 0
    %v118 = vperm.slane %v110, 0
    %v119 = vperm.slane %v111, 0
    %vm120 = vcmp.eq.s32.totalorder %v112, 1
    %vm121 = vcmp.eq.s32.totalorder %v113, 1
    %vm122 = vcmp.eq.s32.totalorder %v114, 1
    %vm123 = vcmp.eq.s32.totalorder %v115, 1
    %vm124 = vcmp.eq.s32.totalorder %v116, 1
    %vm125 = vcmp.eq.s32.totalorder %v117, 1
    %vm126 = vcmp.eq.s32.totalorder %v118, 1
    %vm127 = vcmp.eq.s32.totalorder %v119, 1
    %v128 = vsel %vm120, 4294967295, %v51
    %v129 = vsel %vm121, 4294967295, %v52
    %v130 = vsel %vm122, 4294967295, %v53
    %v131 = vsel %vm123, 4294967295, %v54
    %v132 = vsel %vm124, 4294967295, %v55
    %v133 = vsel %vm125, 4294967295, %v56
    %v134 = vsel %vm126, 4294967295, %v57
    %v135 = vsel %vm127, 4294967295, %v58
    %vm136 = vcmask 1043456
    %v137 = vsel %vm136, %v128, 2147483648
    %v138 = vand.u32 %v137, 65535
    %v139 = vshra.s32 %v137, 16
    %v140 = vcvt.s32.f32 %v138
    %v141 = vcvt.s32.f32 %v139
    %142 = vmax.xlane.f32.xlu0 %v141
    %v143 = vpop.xlane.xlu0 %142
    %vm144 = vcmp.eq.f32.partialorder %v141, %v143
    %v145 = vsel %vm144, %v140, -inf
    %146 = vmax.xlane.f32.xlu0 %v145
    %v147 = vpop.xlane.xlu0 %146
    %v148 = vcvt.f32.s32 %v147
    %v149 = vcvt.f32.s32 %v143
    %v150 = vshll.u32 %v149, 16
    %v151 = vadd.s32 %v150, %v148
    %v152 = vsel %vm136, %v129, 2147483648
    %v153 = vand.u32 %v152, 65535
    %v154 = vshra.s32 %v152, 16
    %v155 = vcvt.s32.f32 %v153
    %v156 = vcvt.s32.f32 %v154
    %157 = vmax.xlane.f32.xlu0 %v156
    %v158 = vpop.xlane.xlu0 %157
    %vm159 = vcmp.eq.f32.partialorder %v156, %v158
    %v160 = vsel %vm159, %v155, -inf
    %161 = vmax.xlane.f32.xlu0 %v160
    %v162 = vpop.xlane.xlu0 %161
    %v163 = vcvt.f32.s32 %v162
    %v164 = vcvt.f32.s32 %v158
    %v165 = vshll.u32 %v164, 16
    %v166 = vadd.s32 %v165, %v163
    %v167 = vsel %vm136, %v130, 2147483648
    %v168 = vand.u32 %v167, 65535
    %v169 = vshra.s32 %v167, 16
    %v170 = vcvt.s32.f32 %v168
    %v171 = vcvt.s32.f32 %v169
    %172 = vmax.xlane.f32.xlu0 %v171
    %v173 = vpop.xlane.xlu0 %172
    %vm174 = vcmp.eq.f32.partialorder %v171, %v173
    %v175 = vsel %vm174, %v170, -inf
    %176 = vmax.xlane.f32.xlu0 %v175
    %v177 = vpop.xlane.xlu0 %176
    %v178 = vcvt.f32.s32 %v177
    %v179 = vcvt.f32.s32 %v173
    %v180 = vshll.u32 %v179, 16
    %v181 = vadd.s32 %v180, %v178
    %v182 = vsel %vm136, %v131, 2147483648
    %v183 = vand.u32 %v182, 65535
    %v184 = vshra.s32 %v182, 16
    %v185 = vcvt.s32.f32 %v183
    %v186 = vcvt.s32.f32 %v184
    %187 = vmax.xlane.f32.xlu0 %v186
    %v188 = vpop.xlane.xlu0 %187
    %vm189 = vcmp.eq.f32.partialorder %v186, %v188
    %v190 = vsel %vm189, %v185, -inf
    %191 = vmax.xlane.f32.xlu0 %v190
    %v192 = vpop.xlane.xlu0 %191
    %v193 = vcvt.f32.s32 %v192
    %v194 = vcvt.f32.s32 %v188
    %v195 = vshll.u32 %v194, 16
    %v196 = vadd.s32 %v195, %v193
    %v197 = vsel %vm136, %v132, 2147483648
    %v198 = vand.u32 %v197, 65535
    %v199 = vshra.s32 %v197, 16
    %v200 = vcvt.s32.f32 %v198
    %v201 = vcvt.s32.f32 %v199
    %202 = vmax.xlane.f32.xlu0 %v201
    %v203 = vpop.xlane.xlu0 %202
    %vm204 = vcmp.eq.f32.partialorder %v201, %v203
    %v205 = vsel %vm204, %v200, -inf
    %206 = vmax.xlane.f32.xlu0 %v205
    %v207 = vpop.xlane.xlu0 %206
    %v208 = vcvt.f32.s32 %v207
    %v209 = vcvt.f32.s32 %v203
    %v210 = vshll.u32 %v209, 16
    %v211 = vadd.s32 %v210, %v208
    %v212 = vsel %vm136, %v133, 2147483648
    %v213 = vand.u32 %v212, 65535
    %v214 = vshra.s32 %v212, 16
    %v215 = vcvt.s32.f32 %v213
    %v216 = vcvt.s32.f32 %v214
    %217 = vmax.xlane.f32.xlu0 %v216
    %v218 = vpop.xlane.xlu0 %217
    %vm219 = vcmp.eq.f32.partialorder %v216, %v218
    %v220 = vsel %vm219, %v215, -inf
    %221 = vmax.xlane.f32.xlu0 %v220
    %v222 = vpop.xlane.xlu0 %221
    %v223 = vcvt.f32.s32 %v222
    %v224 = vcvt.f32.s32 %v218
    %v225 = vshll.u32 %v224, 16
    %v226 = vadd.s32 %v225, %v223
    %v227 = vsel %vm136, %v134, 2147483648
    %v228 = vand.u32 %v227, 65535
    %v229 = vshra.s32 %v227, 16
    %v230 = vcvt.s32.f32 %v228
    %v231 = vcvt.s32.f32 %v229
    %232 = vmax.xlane.f32.xlu0 %v231
    %v233 = vpop.xlane.xlu0 %232
    %vm234 = vcmp.eq.f32.partialorder %v231, %v233
    %v235 = vsel %vm234, %v230, -inf
    %236 = vmax.xlane.f32.xlu0 %v235
    %v237 = vpop.xlane.xlu0 %236
    %v238 = vcvt.f32.s32 %v237
    %v239 = vcvt.f32.s32 %v233
    %v240 = vshll.u32 %v239, 16
    %v241 = vadd.s32 %v240, %v238
    %v242 = vsel %vm136, %v135, 2147483648
    %v243 = vand.u32 %v242, 65535
    %v244 = vshra.s32 %v242, 16
    %v245 = vcvt.s32.f32 %v243
    %v246 = vcvt.s32.f32 %v244
    %247 = vmax.xlane.f32.xlu0 %v246
    %v248 = vpop.xlane.xlu0 %247
    %vm249 = vcmp.eq.f32.partialorder %v246, %v248
    %v250 = vsel %vm249, %v245, -inf
    %251 = vmax.xlane.f32.xlu0 %v250
    %v252 = vpop.xlane.xlu0 %251
    %v253 = vcvt.f32.s32 %v252
    %v254 = vcvt.f32.s32 %v248
    %v255 = vshll.u32 %v254, 16
    %v256 = vadd.s32 %v255, %v253
    %vm257 = vcmp.eq.s32.totalorder %v128, %v151
    %vm258 = vcmp.eq.s32.totalorder %v129, %v166
    %vm259 = vcmp.eq.s32.totalorder %v130, %v181
    %vm260 = vcmp.eq.s32.totalorder %v131, %v196
    %vm261 = vcmp.eq.s32.totalorder %v132, %v211
    %vm262 = vcmp.eq.s32.totalorder %v133, %v226
    %vm263 = vcmp.eq.s32.totalorder %v134, %v241
    %vm264 = vcmp.eq.s32.totalorder %v135, %v256
    %v265 = vrot.slane %v50, 1
    %v266 = vrot.slane %v50, 2
    %v267 = vrot.slane %v50, 3
    %v268 = vrot.slane %v50, 4
    %v269 = vrot.slane %v50, 5
    %v270 = vrot.slane %v50, 6
    %v271 = vrot.slane %v50, 7
    %v272 = vperm.slane %v50, 0
    %v273 = vperm.slane %v265, 0
    %v274 = vperm.slane %v266, 0
    %v275 = vperm.slane %v267, 0
    %v276 = vperm.slane %v268, 0
    %v277 = vperm.slane %v269, 0
    %v278 = vperm.slane %v270, 0
    %v279 = vperm.slane %v271, 0
    %v280 = vsel %vm257, %v272, 2147483649
    %v281 = vsel %vm258, %v273, 2147483649
    %v282 = vsel %vm259, %v274, 2147483649
    %v283 = vsel %vm260, %v275, 2147483649
    %v284 = vsel %vm261, %v276, 2147483649
    %v285 = vsel %vm262, %v277, 2147483649
    %v286 = vsel %vm263, %v278, 2147483649
    %v287 = vsel %vm264, %v279, 2147483649
    %v288 = vsel %vm136, %v280, 2147483648
    %v289 = vand.u32 %v288, 65535
    %v290 = vshra.s32 %v288, 16
    %v291 = vcvt.s32.f32 %v289
    %v292 = vcvt.s32.f32 %v290
    %293 = vmax.xlane.f32.xlu0 %v292
    %v294 = vpop.xlane.xlu0 %293
    %vm295 = vcmp.eq.f32.partialorder %v292, %v294
    %v296 = vsel %vm295, %v291, -inf
    %297 = vmax.xlane.f32.xlu0 %v296
    %v298 = vpop.xlane.xlu0 %297
    %v299 = vcvt.f32.s32 %v298
    %v300 = vcvt.f32.s32 %v294
    %v301 = vshll.u32 %v300, 16
    %v302 = vadd.s32 %v301, %v299
    %v303 = vsel %vm136, %v281, 2147483648
    %v304 = vand.u32 %v303, 65535
    %v305 = vshra.s32 %v303, 16
    %v306 = vcvt.s32.f32 %v304
    %v307 = vcvt.s32.f32 %v305
    %308 = vmax.xlane.f32.xlu0 %v307
    %v309 = vpop.xlane.xlu0 %308
    %vm310 = vcmp.eq.f32.partialorder %v307, %v309
    %v311 = vsel %vm310, %v306, -inf
    %312 = vmax.xlane.f32.xlu0 %v311
    %v313 = vpop.xlane.xlu0 %312
    %v314 = vcvt.f32.s32 %v313
    %v315 = vcvt.f32.s32 %v309
    %v316 = vshll.u32 %v315, 16
    %v317 = vadd.s32 %v316, %v314
    %v318 = vsel %vm136, %v282, 2147483648
    %v319 = vand.u32 %v318, 65535
    %v320 = vshra.s32 %v318, 16
    %v321 = vcvt.s32.f32 %v319
    %v322 = vcvt.s32.f32 %v320
    %323 = vmax.xlane.f32.xlu0 %v322
    %v324 = vpop.xlane.xlu0 %323
    %vm325 = vcmp.eq.f32.partialorder %v322, %v324
    %v326 = vsel %vm325, %v321, -inf
    %327 = vmax.xlane.f32.xlu0 %v326
    %v328 = vpop.xlane.xlu0 %327
    %v329 = vcvt.f32.s32 %v328
    %v330 = vcvt.f32.s32 %v324
    %v331 = vshll.u32 %v330, 16
    %v332 = vadd.s32 %v331, %v329
    %v333 = vsel %vm136, %v283, 2147483648
    %v334 = vand.u32 %v333, 65535
    %v335 = vshra.s32 %v333, 16
    %v336 = vcvt.s32.f32 %v334
    %v337 = vcvt.s32.f32 %v335
    %338 = vmax.xlane.f32.xlu0 %v337
    %v339 = vpop.xlane.xlu0 %338
    %vm340 = vcmp.eq.f32.partialorder %v337, %v339
    %v341 = vsel %vm340, %v336, -inf
    %342 = vmax.xlane.f32.xlu0 %v341
    %v343 = vpop.xlane.xlu0 %342
    %v344 = vcvt.f32.s32 %v343
    %v345 = vcvt.f32.s32 %v339
    %v346 = vshll.u32 %v345, 16
    %v347 = vadd.s32 %v346, %v344
    %v348 = vsel %vm136, %v284, 2147483648
    %v349 = vand.u32 %v348, 65535
    %v350 = vshra.s32 %v348, 16
    %v351 = vcvt.s32.f32 %v349
    %v352 = vcvt.s32.f32 %v350
    %353 = vmax.xlane.f32.xlu0 %v352
    %v354 = vpop.xlane.xlu0 %353
    %vm355 = vcmp.eq.f32.partialorder %v352, %v354
    %v356 = vsel %vm355, %v351, -inf
    %357 = vmax.xlane.f32.xlu0 %v356
    %v358 = vpop.xlane.xlu0 %357
    %v359 = vcvt.f32.s32 %v358
    %v360 = vcvt.f32.s32 %v354
    %v361 = vshll.u32 %v360, 16
    %v362 = vadd.s32 %v361, %v359
    %v363 = vsel %vm136, %v285, 2147483648
    %v364 = vand.u32 %v363, 65535
    %v365 = vshra.s32 %v363, 16
    %v366 = vcvt.s32.f32 %v364
    %v367 = vcvt.s32.f32 %v365
    %368 = vmax.xlane.f32.xlu0 %v367
    %v369 = vpop.xlane.xlu0 %368
    %vm370 = vcmp.eq.f32.partialorder %v367, %v369
    %v371 = vsel %vm370, %v366, -inf
    %372 = vmax.xlane.f32.xlu0 %v371
    %v373 = vpop.xlane.xlu0 %372
    %v374 = vcvt.f32.s32 %v373
    %v375 = vcvt.f32.s32 %v369
    %v376 = vshll.u32 %v375, 16
    %v377 = vadd.s32 %v376, %v374
    %v378 = vsel %vm136, %v286, 2147483648
    %v379 = vand.u32 %v378, 65535
    %v380 = vshra.s32 %v378, 16
    %v381 = vcvt.s32.f32 %v379
    %v382 = vcvt.s32.f32 %v380
    %383 = vmax.xlane.f32.xlu0 %v382
    %v384 = vpop.xlane.xlu0 %383
    %vm385 = vcmp.eq.f32.partialorder %v382, %v384
    %v386 = vsel %vm385, %v381, -inf
    %387 = vmax.xlane.f32.xlu0 %v386
    %v388 = vpop.xlane.xlu0 %387
    %v389 = vcvt.f32.s32 %v388
    %v390 = vcvt.f32.s32 %v384
    %v391 = vshll.u32 %v390, 16
    %v392 = vadd.s32 %v391, %v389
    %v393 = vsel %vm136, %v287, 2147483648
    %v394 = vand.u32 %v393, 65535
    %v395 = vshra.s32 %v393, 16
    %v396 = vcvt.s32.f32 %v394
    %v397 = vcvt.s32.f32 %v395
    %398 = vmax.xlane.f32.xlu0 %v397
    %v399 = vpop.xlane.xlu0 %398
    %vm400 = vcmp.eq.f32.partialorder %v397, %v399
    %v401 = vsel %vm400, %v396, -inf
    %402 = vmax.xlane.f32.xlu0 %v401
    %v403 = vpop.xlane.xlu0 %402
    %v404 = vcvt.f32.s32 %v403
    %v405 = vcvt.f32.s32 %v399
    %v406 = vshll.u32 %v405, 16
    %v407 = vadd.s32 %v406, %v404
    %v408 = vlaneseq
    %v409 = vand.u32 %v408, 127
    %v410 = vperm.slane %v302, %v409
    %v411 = vperm.slane %v317, %v409
    %v412 = vperm.slane %v332, %v409
    %v413 = vperm.slane %v347, %v409
    %v414 = vperm.slane %v362, %v409
    %v415 = vperm.slane %v377, %v409
    %v416 = vperm.slane %v392, %v409
    %v417 = vperm.slane %v407, %v409
    %vm418 = vcmask 1041409
    %v419 = vsel %vm418, %v411, %v410
    %vm420 = vcmask 1042434
    %v421 = vsel %vm420, %v412, %v419
    %vm422 = vcmask 1043459
    %v423 = vsel %vm422, %v413, %v421
    %vm424 = vcmask 1044484
    %v425 = vsel %vm424, %v414, %v423
    %vm426 = vcmask 1045509
    %v427 = vsel %vm426, %v415, %v425
    %vm428 = vcmask 1046534
    %v429 = vsel %vm428, %v416, %v427
    %vm430 = vcmask 1047559
    %v431 = vsel %vm430, %v417, %v429
    %vm432 = vcmask 31744
    %433 = vst.msk [vmem:[%s3] sm:$0xff] %vm432, %v431
    // Predicated region
    $region18: #{tpu_custom_call.1} parent=1 // pred_check
      _
    $region19: #{tpu_custom_call.1} parent=1 // pred_check_branch
      %435 = sbr.rel (0) target = $region21
    $region20: #{tpu_custom_call.1} parent=1 // pred_region
      _
    $region21: #{tpu_custom_call.1} parent=1 // pred_fallthru
      _
    // Predicated region
    $region22: #{tpu_custom_call.1} parent=1 // pred_check
      _
    $region23: #{tpu_custom_call.1} parent=1 // pred_check_branch
      %437 = sbr.rel (0) target = $region25
    $region24: #{tpu_custom_call.1} parent=1 // pred_region
      _
    $region25: #{tpu_custom_call.1} parent=1 // pred_fallthru
      _
    %438 = vsyncpa [#allocation5], 1
    %439 = vsyncpa [#allocation7], 1

</llo_original>
